<compile_context>
chip_gen: v7x
topology: tpu7x:2x2x1
jax: 0.10.0
libtpu: 0.0.40
codegen_flags: <defaults>
</compile_context>

<pallas_src>
import functools

import jax
import jax.numpy as jnp
from jax.experimental import pallas as pl
from jax.experimental.pallas import tpu as pltpu


def _gcl_loss_kernel(cosine_ref, target_ref, noise_ref, m_scaled_ref, out_ref,
                     *, m, s, gamma, train_cls, batch):
    """One batch tile: (TB, C) -> per-tile partial sum of per-sample losses."""
    cosine = cosine_ref[...].astype(jnp.float32)     # (TB, C) f32 compute
    noise = noise_ref[...].astype(jnp.float32)       # (TB, C)
    m_scaled = m_scaled_ref[...]                     # (1, C) f32
    target = target_ref[...]                         # (TB, 1) i32

    tb, c = cosine.shape

    # one-hot(target) via iota compare (== torch scatter_ on dim 1)
    col = jax.lax.broadcasted_iota(jnp.int32, (tb, c), 1)
    onehot = col == target                           # (TB, C) bool

    # cosine - noise_mul * |noise| / m_list.max() * m_list
    # (noise_mul / m_list.max() already folded into m_scaled in the wrapper)
    adj = cosine - jnp.abs(noise) * m_scaled
    z = s * jnp.where(onehot, adj - m, adj)          # (TB, C) f32

    # per-sample cross entropy: logsumexp(z) - z[target]
    zmax = jnp.max(z, axis=-1, keepdims=True)                     # (TB, 1)
    lse = zmax + jnp.log(jnp.sum(jnp.exp(z - zmax), axis=-1,
                                 keepdims=True))                  # (TB, 1)
    picked = jnp.sum(jnp.where(onehot, z, 0.0), axis=-1,
                     keepdims=True)                               # (TB, 1)
    ce = lse - picked                                             # (TB, 1)

    if train_cls and gamma != 0.0:
        # focal weighting: (1 - exp(-ce))**gamma * ce
        p = jnp.exp(-ce)
        w = jnp.maximum(1.0 - p, 0.0)   # clamp: rounding can push p above 1
        gi = int(round(gamma))
        if abs(gamma - gi) < 1e-12 and 0 <= gi <= 8:
            wg = jnp.ones_like(w)
            for _ in range(gi):          # small integer power: VPU multiplies
                wg = wg * w
        else:
            wg = jnp.exp(gamma * jnp.log(jnp.maximum(w, 1e-30)))
        ce = wg * ce

    # mask padded tail rows so they do not contribute to the partial sum
    row = (pl.program_id(0) * tb
           + jax.lax.broadcasted_iota(jnp.int32, (tb, 1), 0))
    ce = jnp.where(row < batch, ce, 0.0)

    # per-tile partial sum, splatted across a lane-dense (8,128)-aligned block
    out_ref[...] = jnp.full(out_ref.shape, jnp.sum(ce), dtype=out_ref.dtype)


def _round_up(x, n):
    return ((x + n - 1) // n) * n


def _sublane_multiple(dtype):
    return {4: 8, 2: 16, 1: 32}.get(jnp.dtype(dtype).itemsize, 8)


def _pick_tile_rows(b, c, cos_dtype, noise_dtype,
                    *, vmem_budget_bytes=16 * 1024 * 1024):
    """Largest batch tile whose 2 double-buffered (TB, C) streams fit budget."""
    sub = max(_sublane_multiple(cos_dtype), _sublane_multiple(noise_dtype))
    bytes_per_row = 2 * c * (jnp.dtype(cos_dtype).itemsize
                             + jnp.dtype(noise_dtype).itemsize)
    tb = (vmem_budget_bytes // max(bytes_per_row, 1)) // sub * sub
    tb = max(sub, min(int(tb), 512, _round_up(b, sub)))
    return tb, sub


def gcl_loss(cosine, target, noise, m_list, *, m=0.5, s=30.0, noise_mul=1.0,
             train_cls=False, gamma=0.0, block_rows=None):
    """Pallas implementation of GCLLoss.forward (weight=None)."""
    # TODO(synk): per-class `weight` (weighted cross-entropy) is not
    #             implemented (module default is weight=None).
    # TODO(synk): Normal(0, 1/3) noise is sampled in plain JAX (caller /
    #             wrapper glue) rather than with the in-kernel TPU PRNG, so
    #             the kernel stays deterministic and checkable vs a reference.
    b, c = cosine.shape
    target2 = target.reshape(b, 1).astype(jnp.int32)

    # Hoist noise_mul / m_list.max() out of the hot loop.
    m_list32 = m_list.astype(jnp.float32)
    m_scaled = (noise_mul * m_list32 / jnp.max(m_list32)).reshape(1, c)

    tb_auto, sub = _pick_tile_rows(b, c, cosine.dtype, noise.dtype)
    tb = tb_auto if block_rows is None else _round_up(int(block_rows), sub)

    b_pad = _round_up(b, tb)
    if b_pad != b:
        pad = b_pad - b
        cosine = jnp.pad(cosine, ((0, pad), (0, 0)))
        noise = jnp.pad(noise, ((0, pad), (0, 0)))
        target2 = jnp.pad(target2, ((0, pad), (0, 0)))
    n_tiles = b_pad // tb

    kernel = functools.partial(
        _gcl_loss_kernel, m=float(m), s=float(s), gamma=float(gamma),
        train_cls=bool(train_cls), batch=int(b))

    partials = pl.pallas_call(
        kernel,
        out_shape=jax.ShapeDtypeStruct((n_tiles, 8, 128), jnp.float32),
        grid=(n_tiles,),
        in_specs=[
            pl.BlockSpec((tb, c), lambda i: (i, 0)),    # cosine (native dtype)
            pl.BlockSpec((tb, 1), lambda i: (i, 0)),    # target
            pl.BlockSpec((tb, c), lambda i: (i, 0)),    # noise (native dtype)
            pl.BlockSpec((1, c), lambda i: (0, 0)),     # per-class margin scale
        ],
        out_specs=pl.BlockSpec((1, 8, 128), lambda i: (i, 0, 0)),
        compiler_params=pltpu.CompilerParams(
            dimension_semantics=("parallel",),
            vmem_limit_bytes=32 * 1024 * 1024),
    )(cosine, target2, noise, m_scaled)

    # Tiny cross-tile reduction + batch mean in plain JAX (keeps the grid axis
    # "parallel" so v7x can shard tiles across both TensorCores).
    return jnp.sum(partials[:, 0, 0]) / b


def make_m_list(cls_num_list):
    """m_list = log(cls).max() - log(cls), as in GCLLoss.__init__."""
    cls_arr = jnp.asarray(cls_num_list, dtype=jnp.float32)
    logs = jnp.log(cls_arr)
    return jnp.max(logs) - logs


if __name__ == "__main__":
    B, C = 40, 16

    # Deterministic long-tailed class-count list (module __init__ argument).
    cls_num_list = [max(1, int(100 * (0.8 ** i))) for i in range(C)]
    m_list = make_m_list(cls_num_list)

    key = jax.random.PRNGKey(0)
    k_cos, k_tgt, k_noise = jax.random.split(key, 3)

    # Stream bf16 inputs (native model dtype); kernel computes in f32.
    cosine = jax.random.uniform(k_cos, (B, C), dtype=jnp.float32,
                                minval=-1.0, maxval=1.0).astype(jnp.bfloat16)
    target = jax.random.randint(k_tgt, (B,), 0, C, dtype=jnp.int32)

    # Normal(0, 1/3) sample, clamped to [-1, 1] (the module's self.simpler).
    noise = jnp.clip(jax.random.normal(k_noise, (B, C), dtype=jnp.float32)
                     * (1.0 / 3.0), -1.0, 1.0).astype(jnp.bfloat16)

    # Pure-JAX reference (same math: f32 compute on the same bf16 inputs).
    cos32 = cosine.astype(jnp.float32)
    noi32 = noise.astype(jnp.float32)
    m_scaled_ref = 1.0 * m_list / jnp.max(m_list)
    adj = cos32 - jnp.abs(noi32) * m_scaled_ref[None, :]
    onehot = jax.nn.one_hot(target, C, dtype=jnp.bool_)
    z = 30.0 * jnp.where(onehot, adj - 0.5, adj)
    ce = (jax.nn.logsumexp(z, axis=-1)
          - jnp.sum(jnp.where(onehot, z, 0.0), axis=-1))

    # 1) plain cross-entropy path; small forced tile (16 rows) to exercise
    #    multi-tile streaming, tail padding and masking.
    loss = gcl_loss(cosine, target, noise, m_list, m=0.5, s=30.0,
                    noise_mul=1.0, train_cls=False, gamma=0.0, block_rows=16)
    jax.block_until_ready(loss)
    ref = jnp.mean(ce)
    assert jnp.allclose(loss, ref, rtol=1e-4, atol=1e-3), (loss, ref)

    # 2) focal path (train_cls=True, integer gamma), auto tile size.
    loss_f = gcl_loss(cosine, target, noise, m_list, m=0.5, s=30.0,
                      noise_mul=1.0, train_cls=True, gamma=2.0)
    jax.block_until_ready(loss_f)
    p = jnp.exp(-ce)
    ref_f = jnp.mean(jnp.maximum(1.0 - p, 0.0) ** 2 * ce)
    assert jnp.allclose(loss_f, ref_f, rtol=1e-4, atol=1e-3), (loss_f, ref_f)

    print("KERNEL_OK")
</pallas_src>

<mosaic_0001>
module attributes {stable_mosaic.version = 11 : i64} {
  func.func @_gcl_loss_kernel(%arg0: i32, %arg1: memref<16x16xbf16, #tpu.memory_space<vmem>>, %arg2: memref<16x1xi32, #tpu.memory_space<vmem>>, %arg3: memref<16x16xbf16, #tpu.memory_space<vmem>>, %arg4: memref<1x16xf32, #tpu.memory_space<vmem>>, %arg5: memref<1x8x128xf32, #tpu.memory_space<vmem>>) attributes {dimension_semantics = [#tpu.dimension_semantics<parallel>], iteration_bounds = array<i64: 3>, scalar_prefetch = 0 : i64, scratch_operands = 0 : i64, tpu.core_type = #tpu.core_type<tc>, window_params = [{transform_indices = @transform_0, window_bounds = array<i64: 16, 16>}, {transform_indices = @transform_1, window_bounds = array<i64: 16, 1>}, {transform_indices = @transform_2, window_bounds = array<i64: 16, 16>}, {pipeline_mode = #tpu.pipeline_mode<synchronous>, transform_indices = @transform_3, window_bounds = array<i64: 1, 16>}, {transform_indices = @transform_4, window_bounds = array<i64: 1, 8, 128>}]} {
    %c0 = arith.constant 0 : index
    %c0_0 = arith.constant 0 : index
    %0 = vector.load %arg1[%c0, %c0_0] : memref<16x16xbf16, #tpu.memory_space<vmem>>, vector<16x16xbf16>
    %1 = arith.extf %0 : vector<16x16xbf16> to vector<16x16xf32>
    %c0_1 = arith.constant 0 : index
    %c0_2 = arith.constant 0 : index
    %2 = vector.load %arg3[%c0_1, %c0_2] : memref<16x16xbf16, #tpu.memory_space<vmem>>, vector<16x16xbf16>
    %3 = arith.extf %2 : vector<16x16xbf16> to vector<16x16xf32>
    %c0_3 = arith.constant 0 : index
    %c0_4 = arith.constant 0 : index
    %4 = vector.load %arg4[%c0_3, %c0_4] : memref<1x16xf32, #tpu.memory_space<vmem>>, vector<1x16xf32>
    %c0_5 = arith.constant 0 : index
    %c0_6 = arith.constant 0 : index
    %5 = vector.load %arg2[%c0_5, %c0_6] : memref<16x1xi32, #tpu.memory_space<vmem>>, vector<16x1xi32>
    %6 = tpu.iota {dimensions = array<i32: 1>} : vector<16x16xi32>
    %7 = vector.broadcast %5 : vector<16x1xi32> to vector<16x16xi32>
    %8 = arith.cmpi eq, %6, %7 : vector<16x16xi32>
    %9 = math.absf %3 : vector<16x16xf32>
    %10 = vector.broadcast %4 : vector<1x16xf32> to vector<16x16xf32>
    %11 = arith.mulf %9, %10 : vector<16x16xf32>
    %12 = arith.subf %1, %11 : vector<16x16xf32>
    %cst = arith.constant 5.000000e-01 : f32
    %13 = vector.broadcast %cst : f32 to vector<16x16xf32>
    %14 = arith.subf %12, %13 : vector<16x16xf32>
    %15 = arith.select %8, %14, %12 : vector<16x16xi1>, vector<16x16xf32>
    %cst_7 = arith.constant 3.000000e+01 : f32
    %16 = vector.broadcast %cst_7 : f32 to vector<16x16xf32>
    %17 = arith.mulf %16, %15 : vector<16x16xf32>
    %cst_8 = arith.constant dense<0xFF800000> : vector<16xf32>
    %18 = vector.multi_reduction <maximumf>, %17, %cst_8 [1] : vector<16x16xf32> to vector<16xf32>
    %19 = vector.shape_cast %18 : vector<16xf32> to vector<16x1xf32>
    %20 = vector.broadcast %19 : vector<16x1xf32> to vector<16x16xf32>
    %21 = arith.subf %17, %20 : vector<16x16xf32>
    %22 = math.exp %21 : vector<16x16xf32>
    %cst_9 = arith.constant dense<0.000000e+00> : vector<16xf32>
    %23 = vector.multi_reduction <add>, %22, %cst_9 [1] : vector<16x16xf32> to vector<16xf32>
    %24 = vector.shape_cast %23 : vector<16xf32> to vector<16x1xf32>
    %25 = math.log %24 : vector<16x1xf32>
    %26 = arith.addf %19, %25 : vector<16x1xf32>
    %cst_10 = arith.constant 0.000000e+00 : f32
    %27 = vector.broadcast %cst_10 : f32 to vector<16x16xf32>
    %28 = arith.select %8, %17, %27 : vector<16x16xi1>, vector<16x16xf32>
    %cst_11 = arith.constant dense<0.000000e+00> : vector<16xf32>
    %29 = vector.multi_reduction <add>, %28, %cst_11 [1] : vector<16x16xf32> to vector<16xf32>
    %30 = vector.shape_cast %29 : vector<16xf32> to vector<16x1xf32>
    %31 = arith.subf %26, %30 : vector<16x1xf32>
    %c16_i32 = arith.constant 16 : i32
    %32 = arith.muli %arg0, %c16_i32 : i32
    %33 = tpu.iota {dimensions = array<i32: 0>} : vector<16x1xi32>
    %34 = vector.broadcast %32 : i32 to vector<16x1xi32>
    %35 = arith.addi %34, %33 : vector<16x1xi32>
    %c40_i32 = arith.constant 40 : i32
    %36 = vector.broadcast %c40_i32 : i32 to vector<16x1xi32>
    %37 = arith.cmpi slt, %35, %36 : vector<16x1xi32>
    %cst_12 = arith.constant 0.000000e+00 : f32
    %38 = vector.broadcast %cst_12 : f32 to vector<16x1xf32>
    %39 = arith.select %37, %31, %38 : vector<16x1xi1>, vector<16x1xf32>
    %40 = vector.shape_cast %39 : vector<16x1xf32> to vector<1x16x1xf32>
    %cst_13 = arith.constant dense<0.000000e+00> : vector<1xf32>
    %41 = vector.multi_reduction <add>, %40, %cst_13 [1, 2] : vector<1x16x1xf32> to vector<1xf32>
    %42 = vector.shape_cast %41 : vector<1xf32> to vector<1x1x1xf32>
    %43 = vector.extract %42[0, 0, 0] : f32 from vector<1x1x1xf32>
    %44 = vector.broadcast %43 : f32 to vector<1x8x128xf32>
    %c0_14 = arith.constant 0 : index
    %c0_15 = arith.constant 0 : index
    %c0_16 = arith.constant 0 : index
    %45 = vector.load %arg5[%c0_14, %c0_15, %c0_16] : memref<1x8x128xf32, #tpu.memory_space<vmem>>, vector<1x8x128xf32>
    tpu.vector_store %arg5[%c0_14, %c0_15, %c0_16], %44 {strides = array<i32>} : memref<1x8x128xf32, #tpu.memory_space<vmem>>, vector<1x8x128xf32>,
    return
  }
  func.func @transform_0(%arg0: i32) -> (i32, i32) {
    %c0_i32 = arith.constant 0 : i32
    %c0_i32_0 = arith.constant 0 : i32
    return %arg0, %c0_i32 : i32, i32
  }
  func.func @transform_1(%arg0: i32) -> (i32, i32) {
    %c0_i32 = arith.constant 0 : i32
    %c0_i32_0 = arith.constant 0 : i32
    return %arg0, %c0_i32 : i32, i32
  }
  func.func @transform_2(%arg0: i32) -> (i32, i32) {
    %c0_i32 = arith.constant 0 : i32
    %c0_i32_0 = arith.constant 0 : i32
    return %arg0, %c0_i32 : i32, i32
  }
  func.func @transform_3(%arg0: i32) -> (i32, i32) {
    %c0_i32 = arith.constant 0 : i32
    %c0_i32_0 = arith.constant 0 : i32
    %c0_i32_1 = arith.constant 0 : i32
    return %c0_i32, %c0_i32_0 : i32, i32
  }
  func.func @transform_4(%arg0: i32) -> (i32, i32, i32) {
    %c0_i32 = arith.constant 0 : i32
    %c0_i32_0 = arith.constant 0 : i32
    %c0_i32_1 = arith.constant 0 : i32
    return %arg0, %c0_i32, %c0_i32_0 : i32, i32, i32
  }
}

</mosaic_0001>

<llo_original>
// kernel: tpu_custom_call.1
$region0: #{tpu_custom_call.1}
  #allocation0 [shape = 'u32[]', space=smem, size = 0x4, offset = 0x4, fixed_abs, tag = 'smem constant byte address 0x4 - core index']
  #allocation1 [shape = 'u32[144,128]{1,0:T(1,128)}', space=vmem, size = 0x12000, scoped, tag = 'internal scratch']
  %s0 = inlined_call_operand.vmem [shape: bf16[48,16], index: 0, kind: input, shape index: {}]
  %s1 = inlined_call_operand.vmem [shape: s32[48,1], index: 1, kind: input, shape index: {}]
  %s2 = inlined_call_operand.vmem [shape: bf16[48,16], index: 2, kind: input, shape index: {}]
  %s3 = inlined_call_operand.vmem [shape: f32[1,16], index: 3, kind: input, shape index: {}]
  %s4 = inlined_call_operand.hbm [shape: f32[3,8,128], index: 4, kind: output, shape index: {}]
  %s5 = sld [smem:[#allocation0]]
  $region49: #{tpu_custom_call.1} parent=0
    _
  %s7 = ssub.s32 1, %s5
  %s8 = scalar_select 0, %s7, %s5
  $region1: #{tpu_custom_call.1} parent=0
    #allocation2 [shape = 'u8[8192]{0}', space=vmem, size = 0x2000, scoped, tag = 'output window, operand 0']
    #allocation3 [shape = 's32[2]{0}', space=sflag, size = 0x8, scoped, tag = 'scoped memory for tpu_custom_call.1']
    %9 = vsyncpa [#allocation3], 0
    %s10 = scalar_lea.sflag [#allocation3], 1
    %11 = vsyncpa %s10, 0
    loop: start=0, step=1, limit=5
    $region2: #{tpu_custom_call.1} parent=1 // loop_pre_header
      _
    $region3: #{tpu_custom_call.1} parent=1 // loop_header
      %s13 = sphi 0, %s17
      %p14 = scmp.ge.s32.totalorder %s13, 5
      %s23 = sphi 0, %s25
      %s26 = sphi 0, %s23
      %s27 = sphi 0, %s26
      %s43 = sphi 0, %s27
      %s49 = sphi 0, %s51
      %s52 = sphi 0, %s49
      %s53 = sphi 0, %s52
      %s69 = sphi 0, %s53
      %s75 = sphi 0, %s77
      %s78 = sphi 0, %s75
      %s79 = sphi 0, %s78
      %s95 = sphi 0, %s79
      %s99 = sphi 0, %s99
      %s101 = sphi 0, %s99
      %s102 = sphi 0, %s101
      %s116 = sphi 0, %s102
      %s122 = sphi 0, %s124
      %s125 = sphi 0, %s122
      %s126 = sphi 0, %s125
      %s142 = sphi 0, %s126
    $region4: #{tpu_custom_call.1} parent=1 // loop_header_branch
      %16 = sbr.rel (%p14) target = $region8
    $region5: #{tpu_custom_call.1} parent=1 // loop_body
      %s18 = ssub.s32 %s13, 1
      %s19 = ssub.s32 %s13, 2
      %s20 = sadd.s32 %s13, 1
      %s21 = ssub.s32 %s13, %s20
      %p22 = scmp.eq.s32.totalorder %s21, 0
      %s24 = sadd.s32 %s23, 1
      %s25 = scalar_select %p22, %s23, %s24
      %p28 = pneg %p22
      %p29 = scmp.eq.s32.totalorder %s13, 2
      %p30 = por %p28, %p29
      %p31 = scmp.ne.s32.totalorder %s23, %s26
      %p32 = scmp.eq.s32.totalorder %s13, 0
      %p33 = por %p31, %p32
      %p34 = scmp.ne.s32.totalorder %s23, %s26
      %p35 = scmp.eq.s32.totalorder %s18, 2
      %p36 = por %p34, %p35
      %p37 = scmp.ne.s32.totalorder %s26, %s27
      %p38 = scmp.eq.s32.totalorder %s18, 0
      %p39 = por %p37, %p38
      %p40 = scmp.ne.s32.totalorder %s26, %s27
      %p41 = scmp.eq.s32.totalorder %s19, 2
      %p42 = por %p40, %p41
      %p44 = scmp.ne.s32.totalorder %s27, %s43
      %p45 = scmp.eq.s32.totalorder %s19, 0
      %p46 = por %p44, %p45
      %s47 = ssub.s32 %s13, %s20
      %p48 = scmp.eq.s32.totalorder %s47, 0
      %s50 = sadd.s32 %s49, 1
      %s51 = scalar_select %p48, %s49, %s50
      %p54 = pneg %p48
      %p55 = scmp.eq.s32.totalorder %s13, 2
      %p56 = por %p54, %p55
      %p57 = scmp.ne.s32.totalorder %s49, %s52
      %p58 = scmp.eq.s32.totalorder %s13, 0
      %p59 = por %p57, %p58
      %p60 = scmp.ne.s32.totalorder %s49, %s52
      %p61 = scmp.eq.s32.totalorder %s18, 2
      %p62 = por %p60, %p61
      %p63 = scmp.ne.s32.totalorder %s52, %s53
      %p64 = scmp.eq.s32.totalorder %s18, 0
      %p65 = por %p63, %p64
      %p66 = scmp.ne.s32.totalorder %s52, %s53
      %p67 = scmp.eq.s32.totalorder %s19, 2
      %p68 = por %p66, %p67
      %p70 = scmp.ne.s32.totalorder %s53, %s69
      %p71 = scmp.eq.s32.totalorder %s19, 0
      %p72 = por %p70, %p71
      %s73 = ssub.s32 %s13, %s20
      %p74 = scmp.eq.s32.totalorder %s73, 0
      %s76 = sadd.s32 %s75, 1
      %s77 = scalar_select %p74, %s75, %s76
      %p80 = pneg %p74
      %p81 = scmp.eq.s32.totalorder %s13, 2
      %p82 = por %p80, %p81
      %p83 = scmp.ne.s32.totalorder %s75, %s78
      %p84 = scmp.eq.s32.totalorder %s13, 0
      %p85 = por %p83, %p84
      %p86 = scmp.ne.s32.totalorder %s75, %s78
      %p87 = scmp.eq.s32.totalorder %s18, 2
      %p88 = por %p86, %p87
      %p89 = scmp.ne.s32.totalorder %s78, %s79
      %p90 = scmp.eq.s32.totalorder %s18, 0
      %p91 = por %p89, %p90
      %p92 = scmp.ne.s32.totalorder %s78, %s79
      %p93 = scmp.eq.s32.totalorder %s19, 2
      %p94 = por %p92, %p93
      %p96 = scmp.ne.s32.totalorder %s79, %s95
      %p97 = scmp.eq.s32.totalorder %s19, 0
      %p98 = por %p96, %p97
      %s100 = sadd.s32 %s99, 1
      %p103 = scmp.eq.s32.totalorder %s13, 2
      %p104 = scmp.ne.s32.totalorder %s99, %s101
      %p105 = scmp.eq.s32.totalorder %s13, 0
      %p106 = por %p104, %p105
      %p107 = scmp.ne.s32.totalorder %s99, %s101
      %p108 = scmp.eq.s32.totalorder %s18, 2
      %p109 = por %p107, %p108
      %p110 = scmp.ne.s32.totalorder %s101, %s102
      %p111 = scmp.eq.s32.totalorder %s18, 0
      %p112 = por %p110, %p111
      %p113 = scmp.ne.s32.totalorder %s101, %s102
      %p114 = scmp.eq.s32.totalorder %s19, 2
      %p115 = por %p113, %p114
      %p117 = scmp.ne.s32.totalorder %s102, %s116
      %p118 = scmp.eq.s32.totalorder %s19, 0
      %p119 = por %p117, %p118
      %s120 = ssub.s32 %s13, %s20
      %p121 = scmp.eq.s32.totalorder %s120, 0
      %s123 = sadd.s32 %s122, 1
      %s124 = scalar_select %p121, %s122, %s123
      %p127 = pneg %p121
      %p128 = scmp.eq.s32.totalorder %s13, 2
      %p129 = por %p127, %p128
      %p130 = scmp.ne.s32.totalorder %s122, %s125
      %p131 = scmp.eq.s32.totalorder %s13, 0
      %p132 = por %p130, %p131
      %p133 = scmp.ne.s32.totalorder %s122, %s125
      %p134 = scmp.eq.s32.totalorder %s18, 2
      %p135 = por %p133, %p134
      %p136 = scmp.ne.s32.totalorder %s125, %s126
      %p137 = scmp.eq.s32.totalorder %s18, 0
      %p138 = por %p136, %p137
      %p139 = scmp.ne.s32.totalorder %s125, %s126
      %p140 = scmp.eq.s32.totalorder %s19, 2
      %p141 = por %p139, %p140
      %p143 = scmp.ne.s32.totalorder %s126, %s142
      %p144 = scmp.eq.s32.totalorder %s19, 0
      %p145 = por %p143, %p144
      %p146 = scmp.le.s32.totalorder 1, %s13
      %p147 = scmp.lt.s32.totalorder %s13, 4
      %p148 = pnand %p146, %p147
      %p149 = pneg %p148
      // Predicated region
      $region9: #{tpu_custom_call.1} parent=5 // pred_check
        _
      $region10: #{tpu_custom_call.1} parent=5 // pred_check_branch
        %151 = sbr.rel (%p148) target = $region12
      $region11: #{tpu_custom_call.1} parent=5 // pred_region
        %s152 = ssub.s32 %s13, 1
        // Predicated region
        $region13: #{tpu_custom_call.1} parent=11 // pred_check
          %p153 = pneg %p112
        $region14: #{tpu_custom_call.1} parent=11 // pred_check_branch
          %155 = sbr.rel (%p153) target = $region16
        $region15: #{tpu_custom_call.1} parent=11 // pred_region
          _
        $region16: #{tpu_custom_call.1} parent=11 // pred_fallthru
          _
      $region12: #{tpu_custom_call.1} parent=5 // pred_fallthru
        _
      %p156 = scmp.lt.s32.totalorder %s13, 3
      // Predicated region
      $region17: #{tpu_custom_call.1} parent=5 // pred_check
        %p157 = pneg %p156
      $region18: #{tpu_custom_call.1} parent=5 // pred_check_branch
        %159 = sbr.rel (%p157) target = $region20
      $region19: #{tpu_custom_call.1} parent=5 // pred_region
        // Predicated region
        $region21: #{tpu_custom_call.1} parent=19 // pred_check
          %p160 = pneg %p33
        $region22: #{tpu_custom_call.1} parent=19 // pred_check_branch
          %162 = sbr.rel (%p160) target = $region24
        $region23: #{tpu_custom_call.1} parent=19 // pred_region
          %s163 = smul.u32 2, %s13
          %p164 = scmp.lt.s32.totalorder %s163, 5
          %s165 = scalar_select %p164, %s163, 5
          %s166 = smul.addr %s165, 4
          %s167 = scalar_lea.vmem %s0, %s166
          %s168 = smul.u32 2, %s13
        $region24: #{tpu_custom_call.1} parent=19 // pred_fallthru
          _
        // Predicated region
        $region25: #{tpu_custom_call.1} parent=19 // pred_check
          %p169 = pneg %p59
        $region26: #{tpu_custom_call.1} parent=19 // pred_check_branch
          %171 = sbr.rel (%p169) target = $region28
        $region27: #{tpu_custom_call.1} parent=19 // pred_region
          %s172 = smul.u32 2, %s13
          %p173 = scmp.lt.s32.totalorder %s172, 5
          %s174 = scalar_select %p173, %s172, 5
          %s175 = smul.addr %s174, 8
          %s176 = scalar_lea.vmem %s1, %s175
          %s177 = smul.u32 2, %s13
        $region28: #{tpu_custom_call.1} parent=19 // pred_fallthru
          _
        // Predicated region
        $region29: #{tpu_custom_call.1} parent=19 // pred_check
          %p178 = pneg %p85
        $region30: #{tpu_custom_call.1} parent=19 // pred_check_branch
          %180 = sbr.rel (%p178) target = $region32
        $region31: #{tpu_custom_call.1} parent=19 // pred_region
          %s181 = smul.u32 2, %s13
          %p182 = scmp.lt.s32.totalorder %s181, 5
          %s183 = scalar_select %p182, %s181, 5
          %s184 = smul.addr %s183, 4
          %s185 = scalar_lea.vmem %s2, %s184
          %s186 = smul.u32 2, %s13
        $region32: #{tpu_custom_call.1} parent=19 // pred_fallthru
          _
      $region20: #{tpu_custom_call.1} parent=5 // pred_fallthru
        _
      %p187 = scmp.le.s32.totalorder 1, %s13
      %p188 = scmp.lt.s32.totalorder %s13, 4
      %p189 = pnand %p187, %p188
      %p190 = pneg %p189
      // Predicated region
      $region33: #{tpu_custom_call.1} parent=5 // pred_check
        _
      $region34: #{tpu_custom_call.1} parent=5 // pred_check_branch
        %192 = sbr.rel (%p189) target = $region36
      $region35: #{tpu_custom_call.1} parent=5 // pred_region
        %s193 = ssub.s32 %s13, 1
        %s194 = smul.u32 2, %s18
        %p195 = scmp.lt.s32.totalorder %s194, 5
        %s196 = scalar_select %p195, %s194, 5
        %s197 = smul.addr %s196, 4
        %s198 = scalar_lea.vmem %s0, %s197
        %p199 = pneg %p39
        %p200 = pneg %p36
        %s201 = smul.u32 2, %s18
        %p202 = scmp.lt.s32.totalorder %s201, 5
        %s203 = scalar_select %p202, %s201, 5
        %s204 = smul.addr %s203, 8
        %s205 = scalar_lea.vmem %s1, %s204
        %p206 = pneg %p65
        %p207 = pneg %p62
        %s208 = smul.u32 2, %s18
        %p209 = scmp.lt.s32.totalorder %s208, 5
        %s210 = scalar_select %p209, %s208, 5
        %s211 = smul.addr %s210, 4
        %s212 = scalar_lea.vmem %s2, %s211
        %p213 = pneg %p91
        %p214 = pneg %p88
        %p215 = pneg %p112
        %p216 = pneg %p109
        %p217 = pneg %p138
        %p218 = pneg %p135
        %s219 = sand.u32 %s125, 1
        %s220 = scalar_lea.sflag [#allocation3], %s219
        %s221 = sand.u32 %s125, 1
        %s222 = smul.addr %s221, 8
        %s223 = scalar_lea.vmem [#allocation2], %s222
        %s224 = smul.u32 2, %s18
        %p225 = scmp.lt.s32.totalorder %s224, 5
        %s226 = scalar_select %p225, %s224, 5
        %s227 = smul.addr %s226, 4
        %s228 = scalar_lea.vmem %s0, %s227
        %s229 = smul.u32 2, %s18
        %s230 = smul.u32 2, %s18
        %p231 = scmp.lt.s32.totalorder %s230, 5
        %s232 = scalar_select %p231, %s230, 5
        %s233 = smul.addr %s232, 8
        %s234 = scalar_lea.vmem %s1, %s233
        %s235 = smul.u32 2, %s18
        %s236 = smul.u32 2, %s18
        %p237 = scmp.lt.s32.totalorder %s236, 5
        %s238 = scalar_select %p237, %s236, 5
        %s239 = smul.addr %s238, 4
        %s240 = scalar_lea.vmem %s2, %s239
        %s241 = smul.u32 2, %s18
        %v242 = vld [vmem:[%s228] sm:$0xf]
        %v243 = vld [vmem:[%s228 + $0x4] sm:$0xf]
        %v244 = vunpack.c.l.bf16 %v242
        %v245 = vunpack.c.l.bf16 %v243
        %v246 = vld [vmem:[%s240] sm:$0xf]
        %v247 = vld [vmem:[%s240 + $0x4] sm:$0xf]
        %v248 = vunpack.c.l.bf16 %v246
        %v249 = vunpack.c.l.bf16 %v247
        %v250 = vld [vmem:[%s3] sm:$0x1]
        %v251 = vld [vmem:[%s234] sm:$0xff]
        %v252 = vld [vmem:[%s234 + $0x8] sm:$0xff]
        %v253 = vlaneseq
        %v254 = vand.u32 %v253, 127
        %255 = vset.pattern.permute.xlu0 0
        %256 = vperm.xlu0 %255, %v251
        %v257 = vpop.permute.xlu0 %256
        %258 = vset.pattern.permute.xlu0 0
        %259 = vperm.xlu0 %258, %v252
        %v260 = vpop.permute.xlu0 %259
        %vm261 = vcmp.eq.s32.totalorder %v254, %v257
        %vm262 = vcmp.eq.s32.totalorder %v254, %v260
        %v263 = vand.u32 2147483647, %v248
        %v264 = vand.u32 2147483647, %v249
        %v266 = vlaneseq
        %v267 = vshrl.u32 %v266, 7
        %v268 = vsub.s32 0, %v267
        %v269 = vrot.slane %v250, %v268
        %v271 = vmul.f32 %v263, %v269
        %v272 = vmul.f32 %v264, %v269
        %v273 = vsub.f32 %v244, %v271
        %v274 = vsub.f32 %v245, %v272
        %v275 = vsub.f32 %v273, 0.5
        %v276 = vsub.f32 %v274, 0.5
        %v277 = vsel %vm261, %v275, %v273
        %v278 = vsel %vm262, %v276, %v274
        %v279 = vmul.f32 %v277, 30.0
        %v280 = vmul.f32 %v278, 30.0
        %vm281 = vcmask 130048
        %v282 = vsel %vm281, %v279, -inf
        %283 = vmax.xlane.f32.xlu0 %v282
        %v284 = vpop.xlane.xlu0 %283
        %v285 = vsel %vm281, %v280, -inf
        %286 = vmax.xlane.f32.xlu0 %v285
        %v287 = vpop.xlane.xlu0 %286
        %v288 = vsub.f32 %v279, %v284
        %v289 = vsub.f32 %v280, %v287
        %v290 = vmul.f32 %v288, 1.442695
        %v291 = vpow.pop %v290
        %v292 = vmul.f32 %v289, 1.442695
        %v293 = vpow.pop %v292
        %v294 = vsel %vm281, %v291, 0.0
        %295 = vadd.xlane.f32.xlu0 %v294
        %v296 = vpop.xlane.xlu0 %295
        %v297 = vsel %vm281, %v293, 0.0
        %298 = vadd.xlane.f32.xlu0 %v297
        %v299 = vpop.xlane.xlu0 %298
        %v300 = vlog2.pop %v296
        %v301 = vmul.f32 %v300, 0.6931472
        %v302 = vlog2.pop %v299
        %v303 = vmul.f32 %v302, 0.6931472
        %v304 = vadd.f32 %v284, %v301
        %v305 = vadd.f32 %v287, %v303
        %v306 = vsel %vm261, %v279, 0.0
        %v307 = vsel %vm262, %v280, 0.0
        %v308 = vsel %vm281, %v306, 0.0
        %309 = vadd.xlane.f32.xlu0 %v308
        %v310 = vpop.xlane.xlu0 %309
        %v311 = vsel %vm281, %v307, 0.0
        %312 = vadd.xlane.f32.xlu0 %v311
        %v313 = vpop.xlane.xlu0 %312
        %v314 = vsub.f32 %v304, %v310
        %v315 = vsub.f32 %v305, %v313
        %s316 = smul.u32 %s18, 16
        %v317 = vlaneseq
        %v318 = vshrl.u32 %v317, 7
        %v319 = vadd.s32 %v318, 8
        %v320 = vstv %s316
        %v321 = vadd.s32 %v320, %v318
        %v322 = vadd.s32 %v320, %v319
        %vm323 = vcmp.lt.s32.totalorder %v321, 40
        %vm324 = vcmp.lt.s32.totalorder %v322, 40
        %v325 = vsel %vm323, %v314, 0.0
        %v326 = vsel %vm324, %v315, 0.0
        %vm327 = vcmask 7168
        %v328 = vsel %vm327, %v325, 0.0
        %v329 = vsel %vm327, %v326, 0.0
        %v330 = vadd.f32 %v328, %v329
        %331 = vadd.xlane.f32.xlu0 %v330
        %v332 = vpop.xlane.xlu0 %331
        %v333 = vrot.slane %v332, 4
        %v334 = vadd.f32 %v332, %v333
        %v335 = vrot.slane %v334, 2
        %v336 = vadd.f32 %v334, %v335
        %v337 = vrot.slane %v336, 1
        %v338 = vadd.f32 %v336, %v337
        %s339 = vtos %v338
        %v340 = vstv %s339
        %341 = vst [vmem:[%s223] sm:$0xff] %v340
        %s342 = sand.u32 %s125, 1
        %s343 = scalar_lea.sflag [#allocation3], %s342
        %s344 = sand.u32 %s125, 1
        %s345 = smul.addr %s344, 8
        %s346 = scalar_lea.vmem [#allocation2], %s345
        // Predicated region
        $region37: #{tpu_custom_call.1} parent=35 // pred_check
          %p347 = pneg %p135
        $region38: #{tpu_custom_call.1} parent=35 // pred_check_branch
          %349 = sbr.rel (%p347) target = $region40
        $region39: #{tpu_custom_call.1} parent=35 // pred_region
          %s351 = ssub.s32 128, 128
          %352 = vsyncadd %s343, %s351
          %s353 = smul.addr %s18, 128
          %s354 = scalar_lea.hbm %s4, %s353
          %s356 = sshll.u32 %s346, 4
          %s357 = int_to_ptr.vmem [resolvable:$true] %s356
          %359 = dma.vmem_to_hbm [thread:$0]  %s357, 128, %s354, %s343
        $region40: #{tpu_custom_call.1} parent=35 // pred_fallthru
          _
      $region36: #{tpu_custom_call.1} parent=5 // pred_fallthru
        _
      %p360 = scmp.le.s32.totalorder 2, %s13
      // Predicated region
      $region41: #{tpu_custom_call.1} parent=5 // pred_check
        %p361 = pneg %p360
      $region42: #{tpu_custom_call.1} parent=5 // pred_check_branch
        %363 = sbr.rel (%p361) target = $region44
      $region43: #{tpu_custom_call.1} parent=5 // pred_region
        %s364 = ssub.s32 %s13, 2
        // Predicated region
        $region45: #{tpu_custom_call.1} parent=43 // pred_check
          %p365 = pneg %p141
        $region46: #{tpu_custom_call.1} parent=43 // pred_check_branch
          %367 = sbr.rel (%p365) target = $region48
        $region47: #{tpu_custom_call.1} parent=43 // pred_region
          %s368 = sand.u32 %s126, 1
          %s369 = scalar_lea.sflag [#allocation3], %s368
          %s370 = sand.u32 %s126, 1
          %s371 = smul.addr %s370, 8
          %s372 = scalar_lea.vmem [#allocation2], %s371
          %373 = dma.done %s369, 128
        $region48: #{tpu_custom_call.1} parent=43 // pred_fallthru
          _
      $region44: #{tpu_custom_call.1} parent=5 // pred_fallthru
        _
    $region6: #{tpu_custom_call.1} parent=1 // loop_footer
      %s17 = sadd.s32 1, %s13
    $region7: #{tpu_custom_call.1} parent=1 // loop_footer_branch
      %12 = sbr.rel target = $region3
    $region8: #{tpu_custom_call.1} parent=1 // loop_exit
      _
    %374 = vsyncpa [#allocation3], 1
    %s375 = scalar_lea.sflag [#allocation3], 1
    %376 = vsyncpa %s375, 1

</llo_original>
